<compile_context>
chip_gen: v7x
topology: tpu7x:2x2x1
jax: 0.10.0
libtpu: 0.0.40
codegen_flags: <defaults>
</compile_context>

<pallas_src>
import functools

import jax
import jax.numpy as jnp
from jax.experimental import pallas as pl
from jax.experimental.pallas import tpu as pltpu


def _round_up(x: int, m: int) -> int:
    return ((x + m - 1) // m) * m


def qnetwork_kernel(x_ref,
                    w1_ref, b1_ref,
                    wh_ref, bh_ref,   # stacked hidden layers: (3,64,64)/(3,1,64)
                    w3_ref, b3_ref,   # final layer, padded only to sublane multiple (8)
                    out_ref):
    """Fused forward pass for one batch tile: 4x (matmul+bias+relu) + final matmul."""
    h = jnp.dot(x_ref[...], w1_ref[...],
                preferred_element_type=jnp.float32) + b1_ref[...]
    h = jnp.maximum(h, 0.0)

    # Three hidden 64->64 layers from the stacked operand (static unroll).
    for k in range(wh_ref.shape[0]):
        h = jnp.dot(h, wh_ref[k],
                    preferred_element_type=jnp.float32) + bh_ref[k]
        h = jnp.maximum(h, 0.0)

    q = jnp.dot(h, w3_ref[...],
                preferred_element_type=jnp.float32) + b3_ref[...]
    out_ref[...] = q.astype(out_ref.dtype)


@functools.partial(jax.jit, static_argnames=("block_batch", "core_parallel"))
def qnetwork_forward(states, params, *, block_batch: int = 4096,
                     core_parallel: bool = False):
    """states: (B, state_dim) float32. params: dict of weights/biases.

    Batch-tiled pallas_call with resident weights and a narrow (round_up(A,8))
    output that is sliced back to action_dim outside the kernel.
    """
    B, state_dim = states.shape
    hidden = params["w1"].shape[1]          # 64
    action_dim = params["w3"].shape[1]

    # Output padded only to the sublane multiple (8), not 128: the store count
    # is the same but HBM writeback drops ~16x for small action_dim.
    out_pad = _round_up(action_dim, 8)

    # --- consolidate / pad parameters (cheap, traced once under jit) ---------
    w_hidden = jnp.stack([params["w2"], params["w2_1"], params["w2_2"]])   # (3,64,64)
    b_hidden = jnp.stack([params["b2"], params["b2_1"], params["b2_2"]])   # (3,1,64)
    w3 = jnp.pad(params["w3"], ((0, 0), (0, out_pad - action_dim)))        # (64,8)
    b3 = jnp.pad(params["b3"], ((0, 0), (0, out_pad - action_dim)))        # (1,8)

    # --- batch tiling --------------------------------------------------------
    # TB = round_up(ceil(B / n_tiles), 8): balanced tiles, avoids near-2x padding
    # when B is slightly above a multiple of block_batch.
    n_tiles = -(-B // block_batch)                    # ceil(B / block_batch)
    TB = _round_up(-(-B // n_tiles), 8)
    B_pad = n_tiles * TB
    x = states if B_pad == B else jnp.pad(states, ((0, B_pad - B), (0, 0)))
    grid = (n_tiles,)

    # Weights/biases: same block for every grid step -> resident in VMEM.
    resident = lambda shape: pl.BlockSpec(shape, lambda i: (0,) * len(shape))

    in_specs = [
        pl.BlockSpec((TB, state_dim), lambda i: (i, 0)),     # x: streamed per tile
        resident((state_dim, hidden)),                        # w1
        resident((1, hidden)),                                # b1
        resident((3, hidden, hidden)),                        # stacked hidden weights
        resident((3, 1, hidden)),                             # stacked hidden biases
        resident((hidden, out_pad)),                          # w3 (narrow, padded to 8)
        resident((1, out_pad)),                               # b3
    ]
    out_spec = pl.BlockSpec((TB, out_pad), lambda i: (i, 0))

    bytes_f32 = 4
    weight_bytes = (state_dim * hidden + hidden + 3 * (hidden * hidden + hidden)
                    + hidden * out_pad + out_pad) * bytes_f32
    cost = pl.CostEstimate(
        flops=2 * B_pad * (state_dim * hidden + 3 * hidden * hidden
                           + hidden * out_pad),
        transcendentals=0,
        bytes_accessed=B_pad * (state_dim + out_pad) * bytes_f32 + weight_bytes,
    )

    # CORE_PARALLEL actually splits the batch axis across the 2 TensorCores on
    # v7x; plain PARALLEL is a no-op generation-wise (1 TC on v5e/v6e).
    batch_sem = pltpu.CORE_PARALLEL if core_parallel else pltpu.PARALLEL

    out_padded = pl.pallas_call(
        qnetwork_kernel,
        out_shape=jax.ShapeDtypeStruct((B_pad, out_pad), jnp.float32),
        grid=grid,
        in_specs=in_specs,
        out_specs=out_spec,
        compiler_params=pltpu.CompilerParams(
            dimension_semantics=(batch_sem,),
            vmem_limit_bytes=32 * 1024 * 1024,   # explicit for v5e's 16 MiB default
        ),
        cost_estimate=cost,
    )(x, params["w1"], params["b1"], w_hidden, b_hidden, w3, b3)

    # Padded batch rows hold bias-propagated garbage; they are sliced off here
    # along with the padded output columns, so callers never see them.
    return out_padded[:B, :action_dim]


# One-time probe result for CORE_PARALLEL support on the current chip/compiler.
_CORE_PARALLEL_OK = None


def qnetwork_apply(states, params, *, block_batch: int = 4096):
    """Dispatcher: prefer CORE_PARALLEL (dual-TC on v7x), fall back to PARALLEL."""
    global _CORE_PARALLEL_OK
    if _CORE_PARALLEL_OK is not False:
        try:
            out = qnetwork_forward(states, params, block_batch=block_batch,
                                   core_parallel=True)
            jax.block_until_ready(out)
            _CORE_PARALLEL_OK = True
            return out
        except Exception:
            _CORE_PARALLEL_OK = False
    return qnetwork_forward(states, params, block_batch=block_batch,
                            core_parallel=False)


def init_params(key, state_dim, action_dim):
    """Deterministic synthetic init (uniform, like PyTorch's default bounds)."""
    dims = [
        ("w1", "b1", state_dim, 64),
        ("w2", "b2", 64, 64),
        ("w2_1", "b2_1", 64, 64),
        ("w2_2", "b2_2", 64, 64),
        ("w3", "b3", 64, action_dim),
    ]
    params = {}
    for wname, bname, fan_in, fan_out in dims:
        key, kw, kb = jax.random.split(key, 3)
        bound = 1.0 / jnp.sqrt(fan_in)
        # weights stored as (in, out) so forward is x @ W + b
        params[wname] = jax.random.uniform(
            kw, (fan_in, fan_out), jnp.float32, -bound, bound)
        # bias kept 2D (1, out) for clean TPU layout / broadcasting
        params[bname] = jax.random.uniform(
            kb, (1, fan_out), jnp.float32, -bound, bound)
    return params


def reference_forward(states, params):
    """Plain-JAX reference matching the PyTorch forward."""
    h = jnp.maximum(states @ params["w1"] + params["b1"], 0.0)
    h = jnp.maximum(h @ params["w2"] + params["b2"], 0.0)
    h = jnp.maximum(h @ params["w2_1"] + params["b2_1"], 0.0)
    h = jnp.maximum(h @ params["w2_2"] + params["b2_2"], 0.0)
    return h @ params["w3"] + params["b3"]


if __name__ == "__main__":
    config = {"state_dim": 8, "action_dim": 4}
    batch = 2

    key = jax.random.PRNGKey(0)
    key, kx = jax.random.split(key)
    states = jax.random.normal(kx, (batch, config["state_dim"]), jnp.float32)
    params = init_params(key, config["state_dim"], config["action_dim"])

    q_values = qnetwork_apply(states, params)
    q_values = jax.block_until_ready(q_values)

    ref = reference_forward(states, params)
    assert q_values.shape == (batch, config["action_dim"])
    # NOTE: MXU default precision decomposes f32 dots into bf16 passes; 1e-5 is
    # comfortable for these tiny contraction sizes (K=8/64).
    assert jnp.allclose(q_values, ref, atol=1e-5, rtol=1e-5)

    print("KERNEL_OK")
</pallas_src>

<mosaic_0001>
module attributes {stable_mosaic.version = 11 : i64} {
  func.func @qnetwork_kernel(%arg0: i32, %arg1: memref<8x8xf32, #tpu.memory_space<vmem>>, %arg2: memref<8x64xf32, #tpu.memory_space<vmem>>, %arg3: memref<1x64xf32, #tpu.memory_space<vmem>>, %arg4: memref<3x64x64xf32, #tpu.memory_space<vmem>>, %arg5: memref<3x1x64xf32, #tpu.memory_space<vmem>>, %arg6: memref<64x8xf32, #tpu.memory_space<vmem>>, %arg7: memref<1x8xf32, #tpu.memory_space<vmem>>, %arg8: memref<8x8xf32, #tpu.memory_space<vmem>>) attributes {dimension_semantics = [#tpu.dimension_semantics<core_parallel>], iteration_bounds = array<i64: 1>, scalar_prefetch = 0 : i64, scratch_operands = 0 : i64, tpu.core_type = #tpu.core_type<tc>, window_params = [{transform_indices = @transform_0, window_bounds = array<i64: 8, 8>}, {pipeline_mode = #tpu.pipeline_mode<synchronous>, transform_indices = @transform_1, window_bounds = array<i64: 8, 64>}, {pipeline_mode = #tpu.pipeline_mode<synchronous>, transform_indices = @transform_2, window_bounds = array<i64: 1, 64>}, {pipeline_mode = #tpu.pipeline_mode<synchronous>, transform_indices = @transform_3, window_bounds = array<i64: 3, 64, 64>}, {pipeline_mode = #tpu.pipeline_mode<synchronous>, transform_indices = @transform_4, window_bounds = array<i64: 3, 1, 64>}, {pipeline_mode = #tpu.pipeline_mode<synchronous>, transform_indices = @transform_5, window_bounds = array<i64: 64, 8>}, {pipeline_mode = #tpu.pipeline_mode<synchronous>, transform_indices = @transform_6, window_bounds = array<i64: 1, 8>}, {transform_indices = @transform_7, window_bounds = array<i64: 8, 8>}]} {
    %c0 = arith.constant 0 : index
    %c0_0 = arith.constant 0 : index
    %0 = vector.load %arg1[%c0, %c0_0] : memref<8x8xf32, #tpu.memory_space<vmem>>, vector<8x8xf32>
    %c0_1 = arith.constant 0 : index
    %c0_2 = arith.constant 0 : index
    %1 = vector.load %arg2[%c0_1, %c0_2] : memref<8x64xf32, #tpu.memory_space<vmem>>, vector<8x64xf32>
    %cst = arith.constant dense<0.000000e+00> : vector<8x64xf32>
    %2 = tpu.matmul %0, %1, %cst {dimension_numbers = #tpu.dot_dimension_numbers<[1], [0], [0], [1], [0, 0, 1, 1], [], []>} : vector<8x8xf32>, vector<8x64xf32>, vector<8x64xf32> -> vector<8x64xf32>
    %c0_3 = arith.constant 0 : index
    %c0_4 = arith.constant 0 : index
    %3 = vector.load %arg3[%c0_3, %c0_4] : memref<1x64xf32, #tpu.memory_space<vmem>>, vector<1x64xf32>
    %4 = vector.broadcast %3 : vector<1x64xf32> to vector<8x64xf32>
    %5 = arith.addf %2, %4 : vector<8x64xf32>
    %cst_5 = arith.constant 0.000000e+00 : f32
    %6 = vector.broadcast %cst_5 : f32 to vector<8x64xf32>
    %7 = arith.maximumf %5, %6 : vector<8x64xf32>
    %c0_6 = arith.constant 0 : index
    %c0_7 = arith.constant 0 : index
    %c0_8 = arith.constant 0 : index
    %8 = vector.load %arg4[%c0_6, %c0_7, %c0_8] : memref<3x64x64xf32, #tpu.memory_space<vmem>>, vector<1x64x64xf32>
    %9 = vector.shape_cast %8 : vector<1x64x64xf32> to vector<64x64xf32>
    %cst_9 = arith.constant dense<0.000000e+00> : vector<8x64xf32>
    %10 = tpu.matmul %7, %9, %cst_9 {dimension_numbers = #tpu.dot_dimension_numbers<[1], [0], [0], [1], [0, 0, 1, 1], [], []>} : vector<8x64xf32>, vector<64x64xf32>, vector<8x64xf32> -> vector<8x64xf32>
    %c0_10 = arith.constant 0 : index
    %c0_11 = arith.constant 0 : index
    %c0_12 = arith.constant 0 : index
    %11 = vector.load %arg5[%c0_10, %c0_11, %c0_12] : memref<3x1x64xf32, #tpu.memory_space<vmem>>, vector<1x1x64xf32>
    %12 = vector.shape_cast %11 : vector<1x1x64xf32> to vector<1x64xf32>
    %13 = vector.broadcast %12 : vector<1x64xf32> to vector<8x64xf32>
    %14 = arith.addf %10, %13 : vector<8x64xf32>
    %cst_13 = arith.constant 0.000000e+00 : f32
    %15 = vector.broadcast %cst_13 : f32 to vector<8x64xf32>
    %16 = arith.maximumf %14, %15 : vector<8x64xf32>
    %c1 = arith.constant 1 : index
    %c0_14 = arith.constant 0 : index
    %c0_15 = arith.constant 0 : index
    %17 = vector.load %arg4[%c1, %c0_14, %c0_15] : memref<3x64x64xf32, #tpu.memory_space<vmem>>, vector<1x64x64xf32>
    %18 = vector.shape_cast %17 : vector<1x64x64xf32> to vector<64x64xf32>
    %cst_16 = arith.constant dense<0.000000e+00> : vector<8x64xf32>
    %19 = tpu.matmul %16, %18, %cst_16 {dimension_numbers = #tpu.dot_dimension_numbers<[1], [0], [0], [1], [0, 0, 1, 1], [], []>} : vector<8x64xf32>, vector<64x64xf32>, vector<8x64xf32> -> vector<8x64xf32>
    %c1_17 = arith.constant 1 : index
    %c0_18 = arith.constant 0 : index
    %c0_19 = arith.constant 0 : index
    %20 = vector.load %arg5[%c1_17, %c0_18, %c0_19] : memref<3x1x64xf32, #tpu.memory_space<vmem>>, vector<1x1x64xf32>
    %21 = vector.shape_cast %20 : vector<1x1x64xf32> to vector<1x64xf32>
    %22 = vector.broadcast %21 : vector<1x64xf32> to vector<8x64xf32>
    %23 = arith.addf %19, %22 : vector<8x64xf32>
    %cst_20 = arith.constant 0.000000e+00 : f32
    %24 = vector.broadcast %cst_20 : f32 to vector<8x64xf32>
    %25 = arith.maximumf %23, %24 : vector<8x64xf32>
    %c2 = arith.constant 2 : index
    %c0_21 = arith.constant 0 : index
    %c0_22 = arith.constant 0 : index
    %26 = vector.load %arg4[%c2, %c0_21, %c0_22] : memref<3x64x64xf32, #tpu.memory_space<vmem>>, vector<1x64x64xf32>
    %27 = vector.shape_cast %26 : vector<1x64x64xf32> to vector<64x64xf32>
    %cst_23 = arith.constant dense<0.000000e+00> : vector<8x64xf32>
    %28 = tpu.matmul %25, %27, %cst_23 {dimension_numbers = #tpu.dot_dimension_numbers<[1], [0], [0], [1], [0, 0, 1, 1], [], []>} : vector<8x64xf32>, vector<64x64xf32>, vector<8x64xf32> -> vector<8x64xf32>
    %c2_24 = arith.constant 2 : index
    %c0_25 = arith.constant 0 : index
    %c0_26 = arith.constant 0 : index
    %29 = vector.load %arg5[%c2_24, %c0_25, %c0_26] : memref<3x1x64xf32, #tpu.memory_space<vmem>>, vector<1x1x64xf32>
    %30 = vector.shape_cast %29 : vector<1x1x64xf32> to vector<1x64xf32>
    %31 = vector.broadcast %30 : vector<1x64xf32> to vector<8x64xf32>
    %32 = arith.addf %28, %31 : vector<8x64xf32>
    %cst_27 = arith.constant 0.000000e+00 : f32
    %33 = vector.broadcast %cst_27 : f32 to vector<8x64xf32>
    %34 = arith.maximumf %32, %33 : vector<8x64xf32>
    %c0_28 = arith.constant 0 : index
    %c0_29 = arith.constant 0 : index
    %35 = vector.load %arg6[%c0_28, %c0_29] : memref<64x8xf32, #tpu.memory_space<vmem>>, vector<64x8xf32>
    %cst_30 = arith.constant dense<0.000000e+00> : vector<8x8xf32>
    %36 = tpu.matmul %34, %35, %cst_30 {dimension_numbers = #tpu.dot_dimension_numbers<[1], [0], [0], [1], [0, 0, 1, 1], [], []>} : vector<8x64xf32>, vector<64x8xf32>, vector<8x8xf32> -> vector<8x8xf32>
    %c0_31 = arith.constant 0 : index
    %c0_32 = arith.constant 0 : index
    %37 = vector.load %arg7[%c0_31, %c0_32] : memref<1x8xf32, #tpu.memory_space<vmem>>, vector<1x8xf32>
    %38 = vector.broadcast %37 : vector<1x8xf32> to vector<8x8xf32>
    %39 = arith.addf %36, %38 : vector<8x8xf32>
    %c0_33 = arith.constant 0 : index
    %c0_34 = arith.constant 0 : index
    %40 = vector.load %arg8[%c0_33, %c0_34] : memref<8x8xf32, #tpu.memory_space<vmem>>, vector<8x8xf32>
    tpu.vector_store %arg8[%c0_33, %c0_34], %39 {strides = array<i32>} : memref<8x8xf32, #tpu.memory_space<vmem>>, vector<8x8xf32>,
    return
  }
  func.func @transform_0(%arg0: i32) -> (i32, i32) {
    %c0_i32 = arith.constant 0 : i32
    %c0_i32_0 = arith.constant 0 : i32
    return %arg0, %c0_i32 : i32, i32
  }
  func.func @transform_1(%arg0: i32) -> (i32, i32) {
    %c0_i32 = arith.constant 0 : i32
    %c0_i32_0 = arith.constant 0 : i32
    %c0_i32_1 = arith.constant 0 : i32
    return %c0_i32, %c0_i32_0 : i32, i32
  }
  func.func @transform_2(%arg0: i32) -> (i32, i32) {
    %c0_i32 = arith.constant 0 : i32
    %c0_i32_0 = arith.constant 0 : i32
    %c0_i32_1 = arith.constant 0 : i32
    return %c0_i32, %c0_i32_0 : i32, i32
  }
  func.func @transform_3(%arg0: i32) -> (i32, i32, i32) {
    %c0_i32 = arith.constant 0 : i32
    %c0_i32_0 = arith.constant 0 : i32
    %c0_i32_1 = arith.constant 0 : i32
    %c0_i32_2 = arith.constant 0 : i32
    return %c0_i32, %c0_i32_0, %c0_i32_1 : i32, i32, i32
  }
  func.func @transform_4(%arg0: i32) -> (i32, i32, i32) {
    %c0_i32 = arith.constant 0 : i32
    %c0_i32_0 = arith.constant 0 : i32
    %c0_i32_1 = arith.constant 0 : i32
    %c0_i32_2 = arith.constant 0 : i32
    return %c0_i32, %c0_i32_0, %c0_i32_1 : i32, i32, i32
  }
  func.func @transform_5(%arg0: i32) -> (i32, i32) {
    %c0_i32 = arith.constant 0 : i32
    %c0_i32_0 = arith.constant 0 : i32
    %c0_i32_1 = arith.constant 0 : i32
    return %c0_i32, %c0_i32_0 : i32, i32
  }
  func.func @transform_6(%arg0: i32) -> (i32, i32) {
    %c0_i32 = arith.constant 0 : i32
    %c0_i32_0 = arith.constant 0 : i32
    %c0_i32_1 = arith.constant 0 : i32
    return %c0_i32, %c0_i32_0 : i32, i32
  }
  func.func @transform_7(%arg0: i32) -> (i32, i32) {
    %c0_i32 = arith.constant 0 : i32
    %c0_i32_0 = arith.constant 0 : i32
    return %arg0, %c0_i32 : i32, i32
  }
}

module attributes {stable_mosaic.version = 11 : i64} {
  func.func @qnetwork_kernel(%arg0: i32, %arg1: memref<8x8xf32, #tpu.memory_space<vmem>>, %arg2: memref<8x64xf32, #tpu.memory_space<vmem>>, %arg3: memref<1x64xf32, #tpu.memory_space<vmem>>, %arg4: memref<3x64x64xf32, #tpu.memory_space<vmem>>, %arg5: memref<3x1x64xf32, #tpu.memory_space<vmem>>, %arg6: memref<64x8xf32, #tpu.memory_space<vmem>>, %arg7: memref<1x8xf32, #tpu.memory_space<vmem>>, %arg8: memref<8x8xf32, #tpu.memory_space<vmem>>) attributes {dimension_semantics = [#tpu.dimension_semantics<parallel>], iteration_bounds = array<i64: 1>, scalar_prefetch = 0 : i64, scratch_operands = 0 : i64, tpu.core_type = #tpu.core_type<tc>, window_params = [{transform_indices = @transform_0, window_bounds = array<i64: 8, 8>}, {pipeline_mode = #tpu.pipeline_mode<synchronous>, transform_indices = @transform_1, window_bounds = array<i64: 8, 64>}, {pipeline_mode = #tpu.pipeline_mode<synchronous>, transform_indices = @transform_2, window_bounds = array<i64: 1, 64>}, {pipeline_mode = #tpu.pipeline_mode<synchronous>, transform_indices = @transform_3, window_bounds = array<i64: 3, 64, 64>}, {pipeline_mode = #tpu.pipeline_mode<synchronous>, transform_indices = @transform_4, window_bounds = array<i64: 3, 1, 64>}, {pipeline_mode = #tpu.pipeline_mode<synchronous>, transform_indices = @transform_5, window_bounds = array<i64: 64, 8>}, {pipeline_mode = #tpu.pipeline_mode<synchronous>, transform_indices = @transform_6, window_bounds = array<i64: 1, 8>}, {transform_indices = @transform_7, window_bounds = array<i64: 8, 8>}]} {
    %c0 = arith.constant 0 : index
    %c0_0 = arith.constant 0 : index
    %0 = vector.load %arg1[%c0, %c0_0] : memref<8x8xf32, #tpu.memory_space<vmem>>, vector<8x8xf32>
    %c0_1 = arith.constant 0 : index
    %c0_2 = arith.constant 0 : index
    %1 = vector.load %arg2[%c0_1, %c0_2] : memref<8x64xf32, #tpu.memory_space<vmem>>, vector<8x64xf32>
    %cst = arith.constant dense<0.000000e+00> : vector<8x64xf32>
    %2 = tpu.matmul %0, %1, %cst {dimension_numbers = #tpu.dot_dimension_numbers<[1], [0], [0], [1], [0, 0, 1, 1], [], []>} : vector<8x8xf32>, vector<8x64xf32>, vector<8x64xf32> -> vector<8x64xf32>
    %c0_3 = arith.constant 0 : index
    %c0_4 = arith.constant 0 : index
    %3 = vector.load %arg3[%c0_3, %c0_4] : memref<1x64xf32, #tpu.memory_space<vmem>>, vector<1x64xf32>
    %4 = vector.broadcast %3 : vector<1x64xf32> to vector<8x64xf32>
    %5 = arith.addf %2, %4 : vector<8x64xf32>
    %cst_5 = arith.constant 0.000000e+00 : f32
    %6 = vector.broadcast %cst_5 : f32 to vector<8x64xf32>
    %7 = arith.maximumf %5, %6 : vector<8x64xf32>
    %c0_6 = arith.constant 0 : index
    %c0_7 = arith.constant 0 : index
    %c0_8 = arith.constant 0 : index
    %8 = vector.load %arg4[%c0_6, %c0_7, %c0_8] : memref<3x64x64xf32, #tpu.memory_space<vmem>>, vector<1x64x64xf32>
    %9 = vector.shape_cast %8 : vector<1x64x64xf32> to vector<64x64xf32>
    %cst_9 = arith.constant dense<0.000000e+00> : vector<8x64xf32>
    %10 = tpu.matmul %7, %9, %cst_9 {dimension_numbers = #tpu.dot_dimension_numbers<[1], [0], [0], [1], [0, 0, 1, 1], [], []>} : vector<8x64xf32>, vector<64x64xf32>, vector<8x64xf32> -> vector<8x64xf32>
    %c0_10 = arith.constant 0 : index
    %c0_11 = arith.constant 0 : index
    %c0_12 = arith.constant 0 : index
    %11 = vector.load %arg5[%c0_10, %c0_11, %c0_12] : memref<3x1x64xf32, #tpu.memory_space<vmem>>, vector<1x1x64xf32>
    %12 = vector.shape_cast %11 : vector<1x1x64xf32> to vector<1x64xf32>
    %13 = vector.broadcast %12 : vector<1x64xf32> to vector<8x64xf32>
    %14 = arith.addf %10, %13 : vector<8x64xf32>
    %cst_13 = arith.constant 0.000000e+00 : f32
    %15 = vector.broadcast %cst_13 : f32 to vector<8x64xf32>
    %16 = arith.maximumf %14, %15 : vector<8x64xf32>
    %c1 = arith.constant 1 : index
    %c0_14 = arith.constant 0 : index
    %c0_15 = arith.constant 0 : index
    %17 = vector.load %arg4[%c1, %c0_14, %c0_15] : memref<3x64x64xf32, #tpu.memory_space<vmem>>, vector<1x64x64xf32>
    %18 = vector.shape_cast %17 : vector<1x64x64xf32> to vector<64x64xf32>
    %cst_16 = arith.constant dense<0.000000e+00> : vector<8x64xf32>
    %19 = tpu.matmul %16, %18, %cst_16 {dimension_numbers = #tpu.dot_dimension_numbers<[1], [0], [0], [1], [0, 0, 1, 1], [], []>} : vector<8x64xf32>, vector<64x64xf32>, vector<8x64xf32> -> vector<8x64xf32>
    %c1_17 = arith.constant 1 : index
    %c0_18 = arith.constant 0 : index
    %c0_19 = arith.constant 0 : index
    %20 = vector.load %arg5[%c1_17, %c0_18, %c0_19] : memref<3x1x64xf32, #tpu.memory_space<vmem>>, vector<1x1x64xf32>
    %21 = vector.shape_cast %20 : vector<1x1x64xf32> to vector<1x64xf32>
    %22 = vector.broadcast %21 : vector<1x64xf32> to vector<8x64xf32>
    %23 = arith.addf %19, %22 : vector<8x64xf32>
    %cst_20 = arith.constant 0.000000e+00 : f32
    %24 = vector.broadcast %cst_20 : f32 to vector<8x64xf32>
    %25 = arith.maximumf %23, %24 : vector<8x64xf32>
    %c2 = arith.constant 2 : index
    %c0_21 = arith.constant 0 : index
    %c0_22 = arith.constant 0 : index
    %26 = vector.load %arg4[%c2, %c0_21, %c0_22] : memref<3x64x64xf32, #tpu.memory_space<vmem>>, vector<1x64x64xf32>
    %27 = vector.shape_cast %26 : vector<1x64x64xf32> to vector<64x64xf32>
    %cst_23 = arith.constant dense<0.000000e+00> : vector<8x64xf32>
    %28 = tpu.matmul %25, %27, %cst_23 {dimension_numbers = #tpu.dot_dimension_numbers<[1], [0], [0], [1], [0, 0, 1, 1], [], []>} : vector<8x64xf32>, vector<64x64xf32>, vector<8x64xf32> -> vector<8x64xf32>
    %c2_24 = arith.constant 2 : index
    %c0_25 = arith.constant 0 : index
    %c0_26 = arith.constant 0 : index
    %29 = vector.load %arg5[%c2_24, %c0_25, %c0_26] : memref<3x1x64xf32, #tpu.memory_space<vmem>>, vector<1x1x64xf32>
    %30 = vector.shape_cast %29 : vector<1x1x64xf32> to vector<1x64xf32>
    %31 = vector.broadcast %30 : vector<1x64xf32> to vector<8x64xf32>
    %32 = arith.addf %28, %31 : vector<8x64xf32>
    %cst_27 = arith.constant 0.000000e+00 : f32
    %33 = vector.broadcast %cst_27 : f32 to vector<8x64xf32>
    %34 = arith.maximumf %32, %33 : vector<8x64xf32>
    %c0_28 = arith.constant 0 : index
    %c0_29 = arith.constant 0 : index
    %35 = vector.load %arg6[%c0_28, %c0_29] : memref<64x8xf32, #tpu.memory_space<vmem>>, vector<64x8xf32>
    %cst_30 = arith.constant dense<0.000000e+00> : vector<8x8xf32>
    %36 = tpu.matmul %34, %35, %cst_30 {dimension_numbers = #tpu.dot_dimension_numbers<[1], [0], [0], [1], [0, 0, 1, 1], [], []>} : vector<8x64xf32>, vector<64x8xf32>, vector<8x8xf32> -> vector<8x8xf32>
    %c0_31 = arith.constant 0 : index
    %c0_32 = arith.constant 0 : index
    %37 = vector.load %arg7[%c0_31, %c0_32] : memref<1x8xf32, #tpu.memory_space<vmem>>, vector<1x8xf32>
    %38 = vector.broadcast %37 : vector<1x8xf32> to vector<8x8xf32>
    %39 = arith.addf %36, %38 : vector<8x8xf32>
    %c0_33 = arith.constant 0 : index
    %c0_34 = arith.constant 0 : index
    %40 = vector.load %arg8[%c0_33, %c0_34] : memref<8x8xf32, #tpu.memory_space<vmem>>, vector<8x8xf32>
    tpu.vector_store %arg8[%c0_33, %c0_34], %39 {strides = array<i32>} : memref<8x8xf32, #tpu.memory_space<vmem>>, vector<8x8xf32>,
    return
  }
  func.func @transform_0(%arg0: i32) -> (i32, i32) {
    %c0_i32 = arith.constant 0 : i32
    %c0_i32_0 = arith.constant 0 : i32
    return %arg0, %c0_i32 : i32, i32
  }
  func.func @transform_1(%arg0: i32) -> (i32, i32) {
    %c0_i32 = arith.constant 0 : i32
    %c0_i32_0 = arith.constant 0 : i32
    %c0_i32_1 = arith.constant 0 : i32
    return %c0_i32, %c0_i32_0 : i32, i32
  }
  func.func @transform_2(%arg0: i32) -> (i32, i32) {
    %c0_i32 = arith.constant 0 : i32
    %c0_i32_0 = arith.constant 0 : i32
    %c0_i32_1 = arith.constant 0 : i32
    return %c0_i32, %c0_i32_0 : i32, i32
  }
  func.func @transform_3(%arg0: i32) -> (i32, i32, i32) {
    %c0_i32 = arith.constant 0 : i32
    %c0_i32_0 = arith.constant 0 : i32
    %c0_i32_1 = arith.constant 0 : i32
    %c0_i32_2 = arith.constant 0 : i32
    return %c0_i32, %c0_i32_0, %c0_i32_1 : i32, i32, i32
  }
  func.func @transform_4(%arg0: i32) -> (i32, i32, i32) {
    %c0_i32 = arith.constant 0 : i32
    %c0_i32_0 = arith.constant 0 : i32
    %c0_i32_1 = arith.constant 0 : i32
    %c0_i32_2 = arith.constant 0 : i32
    return %c0_i32, %c0_i32_0, %c0_i32_1 : i32, i32, i32
  }
  func.func @transform_5(%arg0: i32) -> (i32, i32) {
    %c0_i32 = arith.constant 0 : i32
    %c0_i32_0 = arith.constant 0 : i32
    %c0_i32_1 = arith.constant 0 : i32
    return %c0_i32, %c0_i32_0 : i32, i32
  }
  func.func @transform_6(%arg0: i32) -> (i32, i32) {
    %c0_i32 = arith.constant 0 : i32
    %c0_i32_0 = arith.constant 0 : i32
    %c0_i32_1 = arith.constant 0 : i32
    return %c0_i32, %c0_i32_0 : i32, i32
  }
  func.func @transform_7(%arg0: i32) -> (i32, i32) {
    %c0_i32 = arith.constant 0 : i32
    %c0_i32_0 = arith.constant 0 : i32
    return %arg0, %c0_i32 : i32, i32
  }
}

</mosaic_0001>

<llo_original>
// kernel: qnetwork_forward.1
$region0: #{qnetwork_forward.1}
  #allocation0 [shape = 'u32[]', space=smem, size = 0x4, offset = 0x4, fixed_abs, tag = 'smem constant byte address 0x4 - core index']
  #allocation1 [shape = 'u32[144,128]{1,0:T(1,128)}', space=vmem, size = 0x12000, scoped, tag = 'internal scratch']
  %s0 = inlined_call_operand.vmem [shape: f32[8,8], index: 0, kind: input, shape index: {}]
  %s1 = inlined_call_operand.vmem [shape: f32[8,64], index: 1, kind: input, shape index: {}]
  %s2 = inlined_call_operand.vmem [shape: f32[1,64], index: 2, kind: input, shape index: {}]
  %s3 = inlined_call_operand.vmem [shape: f32[3,64,64], index: 3, kind: input, shape index: {}]
  %s4 = inlined_call_operand.vmem [shape: f32[3,1,64], index: 4, kind: input, shape index: {}]
  %s5 = inlined_call_operand.vmem [shape: f32[64,8], index: 5, kind: input, shape index: {}]
  %s6 = inlined_call_operand.vmem [shape: f32[1,8], index: 6, kind: input, shape index: {}]
  %s7 = inlined_call_operand.vmem [shape: f32[8,8], index: 7, kind: output, shape index: {}]
  %s8 = sld [smem:[#allocation0]]
  $region38: #{qnetwork_forward.1} parent=0
    _
  %s10 = ssub.s32 1, %s8
  %s11 = scalar_select 0, %s10, %s8
  // Predicated region
  $region2: #{qnetwork_forward.1} parent=0 // pred_check
    _
  $region3: #{qnetwork_forward.1} parent=0 // pred_check_branch
    %13 = sbr.rel (0) target = $region5
  $region4: #{qnetwork_forward.1} parent=0 // pred_region
    %p14 = scmp.lt.s32.totalorder %s11, 0
    %s15 = scalar_select %p14, %s11, 0
    %s16 = smul.addr %s15, 8
    %s17 = scalar_lea.vmem %s0, %s16
  $region5: #{qnetwork_forward.1} parent=0 // pred_fallthru
    _
  // Predicated region
  $region6: #{qnetwork_forward.1} parent=0 // pred_check
    _
  $region7: #{qnetwork_forward.1} parent=0 // pred_check_branch
    %19 = sbr.rel (0) target = $region9
  $region8: #{qnetwork_forward.1} parent=0 // pred_region
    _
  $region9: #{qnetwork_forward.1} parent=0 // pred_fallthru
    _
  // Predicated region
  $region10: #{qnetwork_forward.1} parent=0 // pred_check
    _
  $region11: #{qnetwork_forward.1} parent=0 // pred_check_branch
    %21 = sbr.rel (0) target = $region13
  $region12: #{qnetwork_forward.1} parent=0 // pred_region
    _
  $region13: #{qnetwork_forward.1} parent=0 // pred_fallthru
    _
  // Predicated region
  $region14: #{qnetwork_forward.1} parent=0 // pred_check
    _
  $region15: #{qnetwork_forward.1} parent=0 // pred_check_branch
    %23 = sbr.rel (0) target = $region17
  $region16: #{qnetwork_forward.1} parent=0 // pred_region
    _
  $region17: #{qnetwork_forward.1} parent=0 // pred_fallthru
    _
  // Predicated region
  $region18: #{qnetwork_forward.1} parent=0 // pred_check
    _
  $region19: #{qnetwork_forward.1} parent=0 // pred_check_branch
    %25 = sbr.rel (0) target = $region21
  $region20: #{qnetwork_forward.1} parent=0 // pred_region
    _
  $region21: #{qnetwork_forward.1} parent=0 // pred_fallthru
    _
  // Predicated region
  $region22: #{qnetwork_forward.1} parent=0 // pred_check
    _
  $region23: #{qnetwork_forward.1} parent=0 // pred_check_branch
    %27 = sbr.rel (0) target = $region25
  $region24: #{qnetwork_forward.1} parent=0 // pred_region
    _
  $region25: #{qnetwork_forward.1} parent=0 // pred_fallthru
    _
  // Predicated region
  $region26: #{qnetwork_forward.1} parent=0 // pred_check
    _
  $region27: #{qnetwork_forward.1} parent=0 // pred_check_branch
    %29 = sbr.rel (0) target = $region29
  $region28: #{qnetwork_forward.1} parent=0 // pred_region
    _
  $region29: #{qnetwork_forward.1} parent=0 // pred_fallthru
    _
  %p30 = scmp.lt.s32.totalorder %s11, 0
  %s31 = scalar_select %p30, %s11, 0
  %s32 = smul.addr %s31, 8
  %s33 = scalar_lea.vmem %s0, %s32
  %p34 = scmp.lt.s32.totalorder %s11, 0
  %s35 = scalar_select %p34, %s11, 0
  %s36 = smul.addr %s35, 8
  %s37 = scalar_lea.vmem %s7, %s36
  %p38 = scmp.lt.s32.totalorder %s11, 0
  %s39 = scalar_select %p38, %s11, 0
  %s40 = smul.addr %s39, 8
  %s41 = scalar_lea.vmem %s0, %s40
  %p42 = scmp.lt.s32.totalorder %s11, 0
  %s43 = scalar_select %p42, %s11, 0
  %s44 = smul.addr %s43, 8
  %s45 = scalar_lea.vmem %s7, %s44
  %v46 = vld [vmem:[%s41] sm:$0xff]
  %v47 = vld [vmem:[%s1] sm:$0xff]
  %v48 = vld [vmem:[%s2] sm:$0x1]
  %v50 = vlaneseq
  %v51 = vshrl.u32 %v50, 7
  %v52 = vsub.s32 0, %v51
  %v53 = vrot.slane %v48, %v52
  %vm55 = vcmask 64512
  %v57 = vsel %vm55, %v46, 0
  %59 = vmatprep.subr.mxu0 0.0
  %60 = vmatpush1.msra.mxu0 %v47
  %61 = vmatprep.subr.mxu0 0.0
  %62 = vmatpush1.msra.mxu0 0.0
  %63 = vmatprep.subr.mxu0 0.0
  %64 = vmatpush1.msra.mxu0 0.0
  %65 = vmatprep.subr.mxu0 0.0
  %66 = vmatpush1.msra.mxu0 0.0
  %67 = vmatprep.subr.mxu0 0.0
  %68 = vmatpush1.msra.mxu0 0.0
  %69 = vmatprep.subr.mxu0 0.0
  %70 = vmatpush1.msra.mxu0 0.0
  %71 = vmatprep.subr.mxu0 0.0
  %72 = vmatpush1.msra.mxu0 0.0
  %73 = vmatprep.subr.mxu0 0.0
  %74 = vmatpush1.msra.mxu0 0.0
  %75 = vmatprep.subr.mxu0 0.0
  %76 = vmatpush1.msra.mxu0 0.0
  %77 = vmatprep.subr.mxu0 0.0
  %78 = vmatpush1.msra.mxu0 0.0
  %79 = vmatprep.subr.mxu0 0.0
  %80 = vmatpush1.msra.mxu0 0.0
  %81 = vmatprep.subr.mxu0 0.0
  %82 = vmatpush1.msra.mxu0 0.0
  %83 = vmatprep.subr.mxu0 0.0
  %84 = vmatpush1.msra.mxu0 0.0
  %85 = vmatprep.subr.mxu0 0.0
  %86 = vmatpush1.msra.mxu0 0.0
  %87 = vmatprep.subr.mxu0 0.0
  %88 = vmatpush1.msra.mxu0 0.0
  %89 = vmatprep.subr.mxu0 0.0
  %90 = vmatpush1.msra.mxu0 0.0
  %91 = vmatprep.subr.mxu0 0.0
  %92 = vmatpush1.msra.mxu0 0.0
  %93 = vmatprep.subr.mxu0 0.0
  %94 = vmatpush1.msra.mxu0 0.0
  %95 = vmatprep.subr.mxu0 0.0
  %96 = vmatpush1.msra.mxu0 0.0
  %97 = vmatprep.subr.mxu0 0.0
  %98 = vmatpush1.msra.mxu0 0.0
  %99 = vmatprep.subr.mxu0 0.0
  %100 = vmatpush1.msra.mxu0 0.0
  %101 = vmatprep.subr.mxu0 0.0
  %102 = vmatpush1.msra.mxu0 0.0
  %103 = vmatprep.subr.mxu0 0.0
  %104 = vmatpush1.msra.mxu0 0.0
  %105 = vmatprep.subr.mxu0 0.0
  %106 = vmatpush1.msra.mxu0 0.0
  %107 = vmatprep.subr.mxu0 0.0
  %108 = vmatpush1.msra.mxu0 0.0
  %109 = vmatprep.subr.mxu0 0.0
  %110 = vmatpush1.msra.mxu0 0.0
  %111 = vmatprep.subr.mxu0 0.0
  %112 = vmatpush1.msra.mxu0 0.0
  %113 = vmatprep.subr.mxu0 0.0
  %114 = vmatpush1.msra.mxu0 0.0
  %115 = vmatprep.subr.mxu0 0.0
  %116 = vmatpush1.msra.mxu0 0.0
  %117 = vmatprep.subr.mxu0 0.0
  %118 = vmatpush1.msra.mxu0 0.0
  %119 = vmatprep.subr.mxu0 0.0
  %120 = vmatpush1.msra.mxu0 0.0
  %121 = vmatprep.subr.mxu0 0.0
  %122 = vmatpush1.msra.mxu0 0.0
  %123 = vmatprep.mubr.f32.mxu0 0.0
  %124 = vmatmul.mubr.f32.gmra.mrb[0].mxu0 %v57
  %v125 = vpop.f32.mrb[0].mxu0
  %v126 = vadd.f32 %v53, %v125
  %v127 = vpop.f32.mrb[0].mxu0
  %128 = vdwg.mxu0
  %v129 = vmax.f32 %v126, 0.0
  %v130 = vld [vmem:[%s3] sm:$0xff]
  %v131 = vld [vmem:[%s3 + $0x8] sm:$0xff]
  %v132 = vld [vmem:[%s3 + $0x10] sm:$0xff]
  %v133 = vld [vmem:[%s3 + $0x18] sm:$0xff]
  %v134 = vld [vmem:[%s3 + $0x20] sm:$0xff]
  %v135 = vld [vmem:[%s3 + $0x28] sm:$0xff]
  %v136 = vld [vmem:[%s3 + $0x30] sm:$0xff]
  %v137 = vld [vmem:[%s3 + $0x38] sm:$0xff]
  %v138 = vld [vmem:[%s4] sm:$0x1]
  %v140 = vlaneseq
  %v141 = vshrl.u32 %v140, 7
  %v142 = vsub.s32 0, %v141
  %v143 = vrot.slane %v138, %v142
  %vm145 = vcmask 523264
  %v147 = vsel %vm145, %v129, 0
  %149 = vmatprep.subr.mxu0 0.0
  %150 = vmatpush1.msra.mxu0 %v130
  %151 = vmatprep.subr.mxu0 0.0
  %152 = vmatpush1.msra.mxu0 %v131
  %153 = vmatprep.subr.mxu0 0.0
  %154 = vmatpush1.msra.mxu0 %v132
  %155 = vmatprep.subr.mxu0 0.0
  %156 = vmatpush1.msra.mxu0 %v133
  %157 = vmatprep.subr.mxu0 0.0
  %158 = vmatpush1.msra.mxu0 %v134
  %159 = vmatprep.subr.mxu0 0.0
  %160 = vmatpush1.msra.mxu0 %v135
  %161 = vmatprep.subr.mxu0 0.0
  %162 = vmatpush1.msra.mxu0 %v136
  %163 = vmatprep.subr.mxu0 0.0
  %164 = vmatpush1.msra.mxu0 %v137
  %165 = vmatprep.subr.mxu0 0.0
  %166 = vmatpush1.msra.mxu0 0.0
  %167 = vmatprep.subr.mxu0 0.0
  %168 = vmatpush1.msra.mxu0 0.0
  %169 = vmatprep.subr.mxu0 0.0
  %170 = vmatpush1.msra.mxu0 0.0
  %171 = vmatprep.subr.mxu0 0.0
  %172 = vmatpush1.msra.mxu0 0.0
  %173 = vmatprep.subr.mxu0 0.0
  %174 = vmatpush1.msra.mxu0 0.0
  %175 = vmatprep.subr.mxu0 0.0
  %176 = vmatpush1.msra.mxu0 0.0
  %177 = vmatprep.subr.mxu0 0.0
  %178 = vmatpush1.msra.mxu0 0.0
  %179 = vmatprep.subr.mxu0 0.0
  %180 = vmatpush1.msra.mxu0 0.0
  %181 = vmatprep.subr.mxu0 0.0
  %182 = vmatpush1.msra.mxu0 0.0
  %183 = vmatprep.subr.mxu0 0.0
  %184 = vmatpush1.msra.mxu0 0.0
  %185 = vmatprep.subr.mxu0 0.0
  %186 = vmatpush1.msra.mxu0 0.0
  %187 = vmatprep.subr.mxu0 0.0
  %188 = vmatpush1.msra.mxu0 0.0
  %189 = vmatprep.subr.mxu0 0.0
  %190 = vmatpush1.msra.mxu0 0.0
  %191 = vmatprep.subr.mxu0 0.0
  %192 = vmatpush1.msra.mxu0 0.0
  %193 = vmatprep.subr.mxu0 0.0
  %194 = vmatpush1.msra.mxu0 0.0
  %195 = vmatprep.subr.mxu0 0.0
  %196 = vmatpush1.msra.mxu0 0.0
  %197 = vmatprep.subr.mxu0 0.0
  %198 = vmatpush1.msra.mxu0 0.0
  %199 = vmatprep.subr.mxu0 0.0
  %200 = vmatpush1.msra.mxu0 0.0
  %201 = vmatprep.subr.mxu0 0.0
  %202 = vmatpush1.msra.mxu0 0.0
  %203 = vmatprep.subr.mxu0 0.0
  %204 = vmatpush1.msra.mxu0 0.0
  %205 = vmatprep.subr.mxu0 0.0
  %206 = vmatpush1.msra.mxu0 0.0
  %207 = vmatprep.subr.mxu0 0.0
  %208 = vmatpush1.msra.mxu0 0.0
  %209 = vmatprep.subr.mxu0 0.0
  %210 = vmatpush1.msra.mxu0 0.0
  %211 = vmatprep.subr.mxu0 0.0
  %212 = vmatpush1.msra.mxu0 0.0
  %213 = vmatprep.mubr.f32.mxu0 0.0
  %214 = vmatmul.mubr.f32.gmra.mrb[0].mxu0 %v147
  %v215 = vpop.f32.mrb[0].mxu0
  %v216 = vadd.f32 %v143, %v215
  %v217 = vpop.f32.mrb[0].mxu0
  %218 = vdwg.mxu0
  %v219 = vmax.f32 %v216, 0.0
  %s220 = scalar_lea.vmem %s3, 64
  %v221 = vld [vmem:[%s220] sm:$0xff]
  %v222 = vld [vmem:[%s220 + $0x8] sm:$0xff]
  %v223 = vld [vmem:[%s220 + $0x10] sm:$0xff]
  %v224 = vld [vmem:[%s220 + $0x18] sm:$0xff]
  %v225 = vld [vmem:[%s220 + $0x20] sm:$0xff]
  %v226 = vld [vmem:[%s220 + $0x28] sm:$0xff]
  %v227 = vld [vmem:[%s220 + $0x30] sm:$0xff]
  %v228 = vld [vmem:[%s220 + $0x38] sm:$0xff]
  %s229 = scalar_lea.vmem %s4, 1
  %v230 = vld [vmem:[%s229] sm:$0x1]
  %v232 = vlaneseq
  %v233 = vshrl.u32 %v232, 7
  %v234 = vsub.s32 0, %v233
  %v235 = vrot.slane %v230, %v234
  %v238 = vsel %vm145, %v219, 0
  %240 = vmatprep.subr.mxu0 0.0
  %241 = vmatpush1.msra.mxu0 %v221
  %242 = vmatprep.subr.mxu0 0.0
  %243 = vmatpush1.msra.mxu0 %v222
  %244 = vmatprep.subr.mxu0 0.0
  %245 = vmatpush1.msra.mxu0 %v223
  %246 = vmatprep.subr.mxu0 0.0
  %247 = vmatpush1.msra.mxu0 %v224
  %248 = vmatprep.subr.mxu0 0.0
  %249 = vmatpush1.msra.mxu0 %v225
  %250 = vmatprep.subr.mxu0 0.0
  %251 = vmatpush1.msra.mxu0 %v226
  %252 = vmatprep.subr.mxu0 0.0
  %253 = vmatpush1.msra.mxu0 %v227
  %254 = vmatprep.subr.mxu0 0.0
  %255 = vmatpush1.msra.mxu0 %v228
  %256 = vmatprep.subr.mxu0 0.0
  %257 = vmatpush1.msra.mxu0 0.0
  %258 = vmatprep.subr.mxu0 0.0
  %259 = vmatpush1.msra.mxu0 0.0
  %260 = vmatprep.subr.mxu0 0.0
  %261 = vmatpush1.msra.mxu0 0.0
  %262 = vmatprep.subr.mxu0 0.0
  %263 = vmatpush1.msra.mxu0 0.0
  %264 = vmatprep.subr.mxu0 0.0
  %265 = vmatpush1.msra.mxu0 0.0
  %266 = vmatprep.subr.mxu0 0.0
  %267 = vmatpush1.msra.mxu0 0.0
  %268 = vmatprep.subr.mxu0 0.0
  %269 = vmatpush1.msra.mxu0 0.0
  %270 = vmatprep.subr.mxu0 0.0
  %271 = vmatpush1.msra.mxu0 0.0
  %272 = vmatprep.subr.mxu0 0.0
  %273 = vmatpush1.msra.mxu0 0.0
  %274 = vmatprep.subr.mxu0 0.0
  %275 = vmatpush1.msra.mxu0 0.0
  %276 = vmatprep.subr.mxu0 0.0
  %277 = vmatpush1.msra.mxu0 0.0
  %278 = vmatprep.subr.mxu0 0.0
  %279 = vmatpush1.msra.mxu0 0.0
  %280 = vmatprep.subr.mxu0 0.0
  %281 = vmatpush1.msra.mxu0 0.0
  %282 = vmatprep.subr.mxu0 0.0
  %283 = vmatpush1.msra.mxu0 0.0
  %284 = vmatprep.subr.mxu0 0.0
  %285 = vmatpush1.msra.mxu0 0.0
  %286 = vmatprep.subr.mxu0 0.0
  %287 = vmatpush1.msra.mxu0 0.0
  %288 = vmatprep.subr.mxu0 0.0
  %289 = vmatpush1.msra.mxu0 0.0
  %290 = vmatprep.subr.mxu0 0.0
  %291 = vmatpush1.msra.mxu0 0.0
  %292 = vmatprep.subr.mxu0 0.0
  %293 = vmatpush1.msra.mxu0 0.0
  %294 = vmatprep.subr.mxu0 0.0
  %295 = vmatpush1.msra.mxu0 0.0
  %296 = vmatprep.subr.mxu0 0.0
  %297 = vmatpush1.msra.mxu0 0.0
  %298 = vmatprep.subr.mxu0 0.0
  %299 = vmatpush1.msra.mxu0 0.0
  %300 = vmatprep.subr.mxu0 0.0
  %301 = vmatpush1.msra.mxu0 0.0
  %302 = vmatprep.subr.mxu0 0.0
  %303 = vmatpush1.msra.mxu0 0.0
  %304 = vmatprep.mubr.f32.mxu0 0.0
  %305 = vmatmul.mubr.f32.gmra.mrb[0].mxu0 %v238
  %v306 = vpop.f32.mrb[0].mxu0
  %v307 = vadd.f32 %v235, %v306
  %v308 = vpop.f32.mrb[0].mxu0
  %309 = vdwg.mxu0
  %v310 = vmax.f32 %v307, 0.0
  %s311 = scalar_lea.vmem %s3, 128
  %v312 = vld [vmem:[%s311] sm:$0xff]
  %v313 = vld [vmem:[%s311 + $0x8] sm:$0xff]
  %v314 = vld [vmem:[%s311 + $0x10] sm:$0xff]
  %v315 = vld [vmem:[%s311 + $0x18] sm:$0xff]
  %v316 = vld [vmem:[%s311 + $0x20] sm:$0xff]
  %v317 = vld [vmem:[%s311 + $0x28] sm:$0xff]
  %v318 = vld [vmem:[%s311 + $0x30] sm:$0xff]
  %v319 = vld [vmem:[%s311 + $0x38] sm:$0xff]
  %s320 = scalar_lea.vmem %s4, 2
  %v321 = vld [vmem:[%s320] sm:$0x1]
  %v323 = vlaneseq
  %v324 = vshrl.u32 %v323, 7
  %v325 = vsub.s32 0, %v324
  %v326 = vrot.slane %v321, %v325
  %v329 = vsel %vm145, %v310, 0
  %331 = vmatprep.subr.mxu0 0.0
  %332 = vmatpush1.msra.mxu0 %v312
  %333 = vmatprep.subr.mxu0 0.0
  %334 = vmatpush1.msra.mxu0 %v313
  %335 = vmatprep.subr.mxu0 0.0
  %336 = vmatpush1.msra.mxu0 %v314
  %337 = vmatprep.subr.mxu0 0.0
  %338 = vmatpush1.msra.mxu0 %v315
  %339 = vmatprep.subr.mxu0 0.0
  %340 = vmatpush1.msra.mxu0 %v316
  %341 = vmatprep.subr.mxu0 0.0
  %342 = vmatpush1.msra.mxu0 %v317
  %343 = vmatprep.subr.mxu0 0.0
  %344 = vmatpush1.msra.mxu0 %v318
  %345 = vmatprep.subr.mxu0 0.0
  %346 = vmatpush1.msra.mxu0 %v319
  %347 = vmatprep.subr.mxu0 0.0
  %348 = vmatpush1.msra.mxu0 0.0
  %349 = vmatprep.subr.mxu0 0.0
  %350 = vmatpush1.msra.mxu0 0.0
  %351 = vmatprep.subr.mxu0 0.0
  %352 = vmatpush1.msra.mxu0 0.0
  %353 = vmatprep.subr.mxu0 0.0
  %354 = vmatpush1.msra.mxu0 0.0
  %355 = vmatprep.subr.mxu0 0.0
  %356 = vmatpush1.msra.mxu0 0.0
  %357 = vmatprep.subr.mxu0 0.0
  %358 = vmatpush1.msra.mxu0 0.0
  %359 = vmatprep.subr.mxu0 0.0
  %360 = vmatpush1.msra.mxu0 0.0
  %361 = vmatprep.subr.mxu0 0.0
  %362 = vmatpush1.msra.mxu0 0.0
  %363 = vmatprep.subr.mxu0 0.0
  %364 = vmatpush1.msra.mxu0 0.0
  %365 = vmatprep.subr.mxu0 0.0
  %366 = vmatpush1.msra.mxu0 0.0
  %367 = vmatprep.subr.mxu0 0.0
  %368 = vmatpush1.msra.mxu0 0.0
  %369 = vmatprep.subr.mxu0 0.0
  %370 = vmatpush1.msra.mxu0 0.0
  %371 = vmatprep.subr.mxu0 0.0
  %372 = vmatpush1.msra.mxu0 0.0
  %373 = vmatprep.subr.mxu0 0.0
  %374 = vmatpush1.msra.mxu0 0.0
  %375 = vmatprep.subr.mxu0 0.0
  %376 = vmatpush1.msra.mxu0 0.0
  %377 = vmatprep.subr.mxu0 0.0
  %378 = vmatpush1.msra.mxu0 0.0
  %379 = vmatprep.subr.mxu0 0.0
  %380 = vmatpush1.msra.mxu0 0.0
  %381 = vmatprep.subr.mxu0 0.0
  %382 = vmatpush1.msra.mxu0 0.0
  %383 = vmatprep.subr.mxu0 0.0
  %384 = vmatpush1.msra.mxu0 0.0
  %385 = vmatprep.subr.mxu0 0.0
  %386 = vmatpush1.msra.mxu0 0.0
  %387 = vmatprep.subr.mxu0 0.0
  %388 = vmatpush1.msra.mxu0 0.0
  %389 = vmatprep.subr.mxu0 0.0
  %390 = vmatpush1.msra.mxu0 0.0
  %391 = vmatprep.subr.mxu0 0.0
  %392 = vmatpush1.msra.mxu0 0.0
  %393 = vmatprep.subr.mxu0 0.0
  %394 = vmatpush1.msra.mxu0 0.0
  %395 = vmatprep.mubr.f32.mxu0 0.0
  %396 = vmatmul.mubr.f32.gmra.mrb[0].mxu0 %v329
  %v397 = vpop.f32.mrb[0].mxu0
  %v398 = vadd.f32 %v326, %v397
  %v399 = vpop.f32.mrb[0].mxu0
  %400 = vdwg.mxu0
  %v401 = vmax.f32 %v398, 0.0
  %v402 = vld [vmem:[%s5] sm:$0xff]
  %v403 = vld [vmem:[%s5 + $0x8] sm:$0xff]
  %v404 = vld [vmem:[%s5 + $0x10] sm:$0xff]
  %v405 = vld [vmem:[%s5 + $0x18] sm:$0xff]
  %v406 = vld [vmem:[%s5 + $0x20] sm:$0xff]
  %v407 = vld [vmem:[%s5 + $0x28] sm:$0xff]
  %v408 = vld [vmem:[%s5 + $0x30] sm:$0xff]
  %v409 = vld [vmem:[%s5 + $0x38] sm:$0xff]
  %v410 = vld [vmem:[%s6] sm:$0x1]
  %v412 = vlaneseq
  %v413 = vshrl.u32 %v412, 7
  %v414 = vsub.s32 0, %v413
  %v415 = vrot.slane %v410, %v414
  %v418 = vsel %vm145, %v401, 0
  %420 = vmatprep.subr.mxu0 0.0
  %421 = vmatpush1.msra.mxu0 %v402
  %422 = vmatprep.subr.mxu0 0.0
  %423 = vmatpush1.msra.mxu0 %v403
  %424 = vmatprep.subr.mxu0 0.0
  %425 = vmatpush1.msra.mxu0 %v404
  %426 = vmatprep.subr.mxu0 0.0
  %427 = vmatpush1.msra.mxu0 %v405
  %428 = vmatprep.subr.mxu0 0.0
  %429 = vmatpush1.msra.mxu0 %v406
  %430 = vmatprep.subr.mxu0 0.0
  %431 = vmatpush1.msra.mxu0 %v407
  %432 = vmatprep.subr.mxu0 0.0
  %433 = vmatpush1.msra.mxu0 %v408
  %434 = vmatprep.subr.mxu0 0.0
  %435 = vmatpush1.msra.mxu0 %v409
  %436 = vmatprep.subr.mxu0 0.0
  %437 = vmatpush1.msra.mxu0 0.0
  %438 = vmatprep.subr.mxu0 0.0
  %439 = vmatpush1.msra.mxu0 0.0
  %440 = vmatprep.subr.mxu0 0.0
  %441 = vmatpush1.msra.mxu0 0.0
  %442 = vmatprep.subr.mxu0 0.0
  %443 = vmatpush1.msra.mxu0 0.0
  %444 = vmatprep.subr.mxu0 0.0
  %445 = vmatpush1.msra.mxu0 0.0
  %446 = vmatprep.subr.mxu0 0.0
  %447 = vmatpush1.msra.mxu0 0.0
  %448 = vmatprep.subr.mxu0 0.0
  %449 = vmatpush1.msra.mxu0 0.0
  %450 = vmatprep.subr.mxu0 0.0
  %451 = vmatpush1.msra.mxu0 0.0
  %452 = vmatprep.subr.mxu0 0.0
  %453 = vmatpush1.msra.mxu0 0.0
  %454 = vmatprep.subr.mxu0 0.0
  %455 = vmatpush1.msra.mxu0 0.0
  %456 = vmatprep.subr.mxu0 0.0
  %457 = vmatpush1.msra.mxu0 0.0
  %458 = vmatprep.subr.mxu0 0.0
  %459 = vmatpush1.msra.mxu0 0.0
  %460 = vmatprep.subr.mxu0 0.0
  %461 = vmatpush1.msra.mxu0 0.0
  %462 = vmatprep.subr.mxu0 0.0
  %463 = vmatpush1.msra.mxu0 0.0
  %464 = vmatprep.subr.mxu0 0.0
  %465 = vmatpush1.msra.mxu0 0.0
  %466 = vmatprep.subr.mxu0 0.0
  %467 = vmatpush1.msra.mxu0 0.0
  %468 = vmatprep.subr.mxu0 0.0
  %469 = vmatpush1.msra.mxu0 0.0
  %470 = vmatprep.subr.mxu0 0.0
  %471 = vmatpush1.msra.mxu0 0.0
  %472 = vmatprep.subr.mxu0 0.0
  %473 = vmatpush1.msra.mxu0 0.0
  %474 = vmatprep.subr.mxu0 0.0
  %475 = vmatpush1.msra.mxu0 0.0
  %476 = vmatprep.subr.mxu0 0.0
  %477 = vmatpush1.msra.mxu0 0.0
  %478 = vmatprep.subr.mxu0 0.0
  %479 = vmatpush1.msra.mxu0 0.0
  %480 = vmatprep.subr.mxu0 0.0
  %481 = vmatpush1.msra.mxu0 0.0
  %482 = vmatprep.subr.mxu0 0.0
  %483 = vmatpush1.msra.mxu0 0.0
  %484 = vmatprep.mubr.f32.mxu0 0.0
  %485 = vmatmul.mubr.f32.gmra.mrb[0].mxu0 %v418
  %v486 = vpop.f32.mrb[0].mxu0
  %v487 = vadd.f32 %v415, %v486
  %v488 = vpop.f32.mrb[0].mxu0
  %489 = vdwg.mxu0
  %490 = vst.msk [vmem:[%s45] sm:$0xff] %vm55, %v487
  %p491 = scmp.lt.s32.totalorder %s11, 0
  %s492 = scalar_select %p491, %s11, 0
  %s493 = smul.addr %s492, 8
  %s494 = scalar_lea.vmem %s7, %s493
  // Predicated region
  $region30: #{qnetwork_forward.1} parent=0 // pred_check
    _
  $region31: #{qnetwork_forward.1} parent=0 // pred_check_branch
    %496 = sbr.rel (0) target = $region33
  $region32: #{qnetwork_forward.1} parent=0 // pred_region
    _
  $region33: #{qnetwork_forward.1} parent=0 // pred_fallthru
    _
  // Predicated region
  $region34: #{qnetwork_forward.1} parent=0 // pred_check
    _
  $region35: #{qnetwork_forward.1} parent=0 // pred_check_branch
    %498 = sbr.rel (0) target = $region37
  $region36: #{qnetwork_forward.1} parent=0 // pred_region
    %p499 = scmp.lt.s32.totalorder %s11, 0
    %s500 = scalar_select %p499, %s11, 0
    %s501 = smul.addr %s500, 8
    %s502 = scalar_lea.vmem %s7, %s501
  $region37: #{qnetwork_forward.1} parent=0 // pred_fallthru
    _

// kernel: qnetwork_forward.1
$region0: #{qnetwork_forward.1}
  #allocation0 [shape = 'u32[]', space=smem, size = 0x4, offset = 0x4, fixed_abs, tag = 'smem constant byte address 0x4 - core index']
  #allocation1 [shape = 'u32[144,128]{1,0:T(1,128)}', space=vmem, size = 0x12000, scoped, tag = 'internal scratch']
  %s0 = inlined_call_operand.vmem [shape: f32[8,8], index: 0, kind: input, shape index: {}]
  %s1 = inlined_call_operand.vmem [shape: f32[8,64], index: 1, kind: input, shape index: {}]
  %s2 = inlined_call_operand.vmem [shape: f32[1,64], index: 2, kind: input, shape index: {}]
  %s3 = inlined_call_operand.vmem [shape: f32[3,64,64], index: 3, kind: input, shape index: {}]
  %s4 = inlined_call_operand.vmem [shape: f32[3,1,64], index: 4, kind: input, shape index: {}]
  %s5 = inlined_call_operand.vmem [shape: f32[64,8], index: 5, kind: input, shape index: {}]
  %s6 = inlined_call_operand.vmem [shape: f32[1,8], index: 6, kind: input, shape index: {}]
  %s7 = inlined_call_operand.vmem [shape: f32[8,8], index: 7, kind: output, shape index: {}]
  %s8 = sld [smem:[#allocation0]]
  $region38: #{qnetwork_forward.1} parent=0
    _
  %s10 = ssub.s32 1, %s8
  %s11 = scalar_select 0, %s10, %s8
  // Predicated region
  $region2: #{qnetwork_forward.1} parent=0 // pred_check
    _
  $region3: #{qnetwork_forward.1} parent=0 // pred_check_branch
    %13 = sbr.rel (0) target = $region5
  $region4: #{qnetwork_forward.1} parent=0 // pred_region
    _
  $region5: #{qnetwork_forward.1} parent=0 // pred_fallthru
    _
  // Predicated region
  $region6: #{qnetwork_forward.1} parent=0 // pred_check
    _
  $region7: #{qnetwork_forward.1} parent=0 // pred_check_branch
    %15 = sbr.rel (0) target = $region9
  $region8: #{qnetwork_forward.1} parent=0 // pred_region
    _
  $region9: #{qnetwork_forward.1} parent=0 // pred_fallthru
    _
  // Predicated region
  $region10: #{qnetwork_forward.1} parent=0 // pred_check
    _
  $region11: #{qnetwork_forward.1} parent=0 // pred_check_branch
    %17 = sbr.rel (0) target = $region13
  $region12: #{qnetwork_forward.1} parent=0 // pred_region
    _
  $region13: #{qnetwork_forward.1} parent=0 // pred_fallthru
    _
  // Predicated region
  $region14: #{qnetwork_forward.1} parent=0 // pred_check
    _
  $region15: #{qnetwork_forward.1} parent=0 // pred_check_branch
    %19 = sbr.rel (0) target = $region17
  $region16: #{qnetwork_forward.1} parent=0 // pred_region
    _
  $region17: #{qnetwork_forward.1} parent=0 // pred_fallthru
    _
  // Predicated region
  $region18: #{qnetwork_forward.1} parent=0 // pred_check
    _
  $region19: #{qnetwork_forward.1} parent=0 // pred_check_branch
    %21 = sbr.rel (0) target = $region21
  $region20: #{qnetwork_forward.1} parent=0 // pred_region
    _
  $region21: #{qnetwork_forward.1} parent=0 // pred_fallthru
    _
  // Predicated region
  $region22: #{qnetwork_forward.1} parent=0 // pred_check
    _
  $region23: #{qnetwork_forward.1} parent=0 // pred_check_branch
    %23 = sbr.rel (0) target = $region25
  $region24: #{qnetwork_forward.1} parent=0 // pred_region
    _
  $region25: #{qnetwork_forward.1} parent=0 // pred_fallthru
    _
  // Predicated region
  $region26: #{qnetwork_forward.1} parent=0 // pred_check
    _
  $region27: #{qnetwork_forward.1} parent=0 // pred_check_branch
    %25 = sbr.rel (0) target = $region29
  $region28: #{qnetwork_forward.1} parent=0 // pred_region
    _
  $region29: #{qnetwork_forward.1} parent=0 // pred_fallthru
    _
  %v26 = vld [vmem:[%s0] sm:$0xff]
  %v27 = vld [vmem:[%s1] sm:$0xff]
  %v28 = vld [vmem:[%s2] sm:$0x1]
  %v30 = vlaneseq
  %v31 = vshrl.u32 %v30, 7
  %v32 = vsub.s32 0, %v31
  %v33 = vrot.slane %v28, %v32
  %vm35 = vcmask 64512
  %v37 = vsel %vm35, %v26, 0
  %39 = vmatprep.subr.mxu0 0.0
  %40 = vmatpush1.msra.mxu0 %v27
  %41 = vmatprep.subr.mxu0 0.0
  %42 = vmatpush1.msra.mxu0 0.0
  %43 = vmatprep.subr.mxu0 0.0
  %44 = vmatpush1.msra.mxu0 0.0
  %45 = vmatprep.subr.mxu0 0.0
  %46 = vmatpush1.msra.mxu0 0.0
  %47 = vmatprep.subr.mxu0 0.0
  %48 = vmatpush1.msra.mxu0 0.0
  %49 = vmatprep.subr.mxu0 0.0
  %50 = vmatpush1.msra.mxu0 0.0
  %51 = vmatprep.subr.mxu0 0.0
  %52 = vmatpush1.msra.mxu0 0.0
  %53 = vmatprep.subr.mxu0 0.0
  %54 = vmatpush1.msra.mxu0 0.0
  %55 = vmatprep.subr.mxu0 0.0
  %56 = vmatpush1.msra.mxu0 0.0
  %57 = vmatprep.subr.mxu0 0.0
  %58 = vmatpush1.msra.mxu0 0.0
  %59 = vmatprep.subr.mxu0 0.0
  %60 = vmatpush1.msra.mxu0 0.0
  %61 = vmatprep.subr.mxu0 0.0
  %62 = vmatpush1.msra.mxu0 0.0
  %63 = vmatprep.subr.mxu0 0.0
  %64 = vmatpush1.msra.mxu0 0.0
  %65 = vmatprep.subr.mxu0 0.0
  %66 = vmatpush1.msra.mxu0 0.0
  %67 = vmatprep.subr.mxu0 0.0
  %68 = vmatpush1.msra.mxu0 0.0
  %69 = vmatprep.subr.mxu0 0.0
  %70 = vmatpush1.msra.mxu0 0.0
  %71 = vmatprep.subr.mxu0 0.0
  %72 = vmatpush1.msra.mxu0 0.0
  %73 = vmatprep.subr.mxu0 0.0
  %74 = vmatpush1.msra.mxu0 0.0
  %75 = vmatprep.subr.mxu0 0.0
  %76 = vmatpush1.msra.mxu0 0.0
  %77 = vmatprep.subr.mxu0 0.0
  %78 = vmatpush1.msra.mxu0 0.0
  %79 = vmatprep.subr.mxu0 0.0
  %80 = vmatpush1.msra.mxu0 0.0
  %81 = vmatprep.subr.mxu0 0.0
  %82 = vmatpush1.msra.mxu0 0.0
  %83 = vmatprep.subr.mxu0 0.0
  %84 = vmatpush1.msra.mxu0 0.0
  %85 = vmatprep.subr.mxu0 0.0
  %86 = vmatpush1.msra.mxu0 0.0
  %87 = vmatprep.subr.mxu0 0.0
  %88 = vmatpush1.msra.mxu0 0.0
  %89 = vmatprep.subr.mxu0 0.0
  %90 = vmatpush1.msra.mxu0 0.0
  %91 = vmatprep.subr.mxu0 0.0
  %92 = vmatpush1.msra.mxu0 0.0
  %93 = vmatprep.subr.mxu0 0.0
  %94 = vmatpush1.msra.mxu0 0.0
  %95 = vmatprep.subr.mxu0 0.0
  %96 = vmatpush1.msra.mxu0 0.0
  %97 = vmatprep.subr.mxu0 0.0
  %98 = vmatpush1.msra.mxu0 0.0
  %99 = vmatprep.subr.mxu0 0.0
  %100 = vmatpush1.msra.mxu0 0.0
  %101 = vmatprep.subr.mxu0 0.0
  %102 = vmatpush1.msra.mxu0 0.0
  %103 = vmatprep.mubr.f32.mxu0 0.0
  %104 = vmatmul.mubr.f32.gmra.mrb[0].mxu0 %v37
  %v105 = vpop.f32.mrb[0].mxu0
  %v106 = vadd.f32 %v33, %v105
  %v107 = vpop.f32.mrb[0].mxu0
  %108 = vdwg.mxu0
  %v109 = vmax.f32 %v106, 0.0
  %v110 = vld [vmem:[%s3] sm:$0xff]
  %v111 = vld [vmem:[%s3 + $0x8] sm:$0xff]
  %v112 = vld [vmem:[%s3 + $0x10] sm:$0xff]
  %v113 = vld [vmem:[%s3 + $0x18] sm:$0xff]
  %v114 = vld [vmem:[%s3 + $0x20] sm:$0xff]
  %v115 = vld [vmem:[%s3 + $0x28] sm:$0xff]
  %v116 = vld [vmem:[%s3 + $0x30] sm:$0xff]
  %v117 = vld [vmem:[%s3 + $0x38] sm:$0xff]
  %v118 = vld [vmem:[%s4] sm:$0x1]
  %v120 = vlaneseq
  %v121 = vshrl.u32 %v120, 7
  %v122 = vsub.s32 0, %v121
  %v123 = vrot.slane %v118, %v122
  %vm125 = vcmask 523264
  %v127 = vsel %vm125, %v109, 0
  %129 = vmatprep.subr.mxu0 0.0
  %130 = vmatpush1.msra.mxu0 %v110
  %131 = vmatprep.subr.mxu0 0.0
  %132 = vmatpush1.msra.mxu0 %v111
  %133 = vmatprep.subr.mxu0 0.0
  %134 = vmatpush1.msra.mxu0 %v112
  %135 = vmatprep.subr.mxu0 0.0
  %136 = vmatpush1.msra.mxu0 %v113
  %137 = vmatprep.subr.mxu0 0.0
  %138 = vmatpush1.msra.mxu0 %v114
  %139 = vmatprep.subr.mxu0 0.0
  %140 = vmatpush1.msra.mxu0 %v115
  %141 = vmatprep.subr.mxu0 0.0
  %142 = vmatpush1.msra.mxu0 %v116
  %143 = vmatprep.subr.mxu0 0.0
  %144 = vmatpush1.msra.mxu0 %v117
  %145 = vmatprep.subr.mxu0 0.0
  %146 = vmatpush1.msra.mxu0 0.0
  %147 = vmatprep.subr.mxu0 0.0
  %148 = vmatpush1.msra.mxu0 0.0
  %149 = vmatprep.subr.mxu0 0.0
  %150 = vmatpush1.msra.mxu0 0.0
  %151 = vmatprep.subr.mxu0 0.0
  %152 = vmatpush1.msra.mxu0 0.0
  %153 = vmatprep.subr.mxu0 0.0
  %154 = vmatpush1.msra.mxu0 0.0
  %155 = vmatprep.subr.mxu0 0.0
  %156 = vmatpush1.msra.mxu0 0.0
  %157 = vmatprep.subr.mxu0 0.0
  %158 = vmatpush1.msra.mxu0 0.0
  %159 = vmatprep.subr.mxu0 0.0
  %160 = vmatpush1.msra.mxu0 0.0
  %161 = vmatprep.subr.mxu0 0.0
  %162 = vmatpush1.msra.mxu0 0.0
  %163 = vmatprep.subr.mxu0 0.0
  %164 = vmatpush1.msra.mxu0 0.0
  %165 = vmatprep.subr.mxu0 0.0
  %166 = vmatpush1.msra.mxu0 0.0
  %167 = vmatprep.subr.mxu0 0.0
  %168 = vmatpush1.msra.mxu0 0.0
  %169 = vmatprep.subr.mxu0 0.0
  %170 = vmatpush1.msra.mxu0 0.0
  %171 = vmatprep.subr.mxu0 0.0
  %172 = vmatpush1.msra.mxu0 0.0
  %173 = vmatprep.subr.mxu0 0.0
  %174 = vmatpush1.msra.mxu0 0.0
  %175 = vmatprep.subr.mxu0 0.0
  %176 = vmatpush1.msra.mxu0 0.0
  %177 = vmatprep.subr.mxu0 0.0
  %178 = vmatpush1.msra.mxu0 0.0
  %179 = vmatprep.subr.mxu0 0.0
  %180 = vmatpush1.msra.mxu0 0.0
  %181 = vmatprep.subr.mxu0 0.0
  %182 = vmatpush1.msra.mxu0 0.0
  %183 = vmatprep.subr.mxu0 0.0
  %184 = vmatpush1.msra.mxu0 0.0
  %185 = vmatprep.subr.mxu0 0.0
  %186 = vmatpush1.msra.mxu0 0.0
  %187 = vmatprep.subr.mxu0 0.0
  %188 = vmatpush1.msra.mxu0 0.0
  %189 = vmatprep.subr.mxu0 0.0
  %190 = vmatpush1.msra.mxu0 0.0
  %191 = vmatprep.subr.mxu0 0.0
  %192 = vmatpush1.msra.mxu0 0.0
  %193 = vmatprep.mubr.f32.mxu0 0.0
  %194 = vmatmul.mubr.f32.gmra.mrb[0].mxu0 %v127
  %v195 = vpop.f32.mrb[0].mxu0
  %v196 = vadd.f32 %v123, %v195
  %v197 = vpop.f32.mrb[0].mxu0
  %198 = vdwg.mxu0
  %v199 = vmax.f32 %v196, 0.0
  %s200 = scalar_lea.vmem %s3, 64
  %v201 = vld [vmem:[%s200] sm:$0xff]
  %v202 = vld [vmem:[%s200 + $0x8] sm:$0xff]
  %v203 = vld [vmem:[%s200 + $0x10] sm:$0xff]
  %v204 = vld [vmem:[%s200 + $0x18] sm:$0xff]
  %v205 = vld [vmem:[%s200 + $0x20] sm:$0xff]
  %v206 = vld [vmem:[%s200 + $0x28] sm:$0xff]
  %v207 = vld [vmem:[%s200 + $0x30] sm:$0xff]
  %v208 = vld [vmem:[%s200 + $0x38] sm:$0xff]
  %s209 = scalar_lea.vmem %s4, 1
  %v210 = vld [vmem:[%s209] sm:$0x1]
  %v212 = vlaneseq
  %v213 = vshrl.u32 %v212, 7
  %v214 = vsub.s32 0, %v213
  %v215 = vrot.slane %v210, %v214
  %v218 = vsel %vm125, %v199, 0
  %220 = vmatprep.subr.mxu0 0.0
  %221 = vmatpush1.msra.mxu0 %v201
  %222 = vmatprep.subr.mxu0 0.0
  %223 = vmatpush1.msra.mxu0 %v202
  %224 = vmatprep.subr.mxu0 0.0
  %225 = vmatpush1.msra.mxu0 %v203
  %226 = vmatprep.subr.mxu0 0.0
  %227 = vmatpush1.msra.mxu0 %v204
  %228 = vmatprep.subr.mxu0 0.0
  %229 = vmatpush1.msra.mxu0 %v205
  %230 = vmatprep.subr.mxu0 0.0
  %231 = vmatpush1.msra.mxu0 %v206
  %232 = vmatprep.subr.mxu0 0.0
  %233 = vmatpush1.msra.mxu0 %v207
  %234 = vmatprep.subr.mxu0 0.0
  %235 = vmatpush1.msra.mxu0 %v208
  %236 = vmatprep.subr.mxu0 0.0
  %237 = vmatpush1.msra.mxu0 0.0
  %238 = vmatprep.subr.mxu0 0.0
  %239 = vmatpush1.msra.mxu0 0.0
  %240 = vmatprep.subr.mxu0 0.0
  %241 = vmatpush1.msra.mxu0 0.0
  %242 = vmatprep.subr.mxu0 0.0
  %243 = vmatpush1.msra.mxu0 0.0
  %244 = vmatprep.subr.mxu0 0.0
  %245 = vmatpush1.msra.mxu0 0.0
  %246 = vmatprep.subr.mxu0 0.0
  %247 = vmatpush1.msra.mxu0 0.0
  %248 = vmatprep.subr.mxu0 0.0
  %249 = vmatpush1.msra.mxu0 0.0
  %250 = vmatprep.subr.mxu0 0.0
  %251 = vmatpush1.msra.mxu0 0.0
  %252 = vmatprep.subr.mxu0 0.0
  %253 = vmatpush1.msra.mxu0 0.0
  %254 = vmatprep.subr.mxu0 0.0
  %255 = vmatpush1.msra.mxu0 0.0
  %256 = vmatprep.subr.mxu0 0.0
  %257 = vmatpush1.msra.mxu0 0.0
  %258 = vmatprep.subr.mxu0 0.0
  %259 = vmatpush1.msra.mxu0 0.0
  %260 = vmatprep.subr.mxu0 0.0
  %261 = vmatpush1.msra.mxu0 0.0
  %262 = vmatprep.subr.mxu0 0.0
  %263 = vmatpush1.msra.mxu0 0.0
  %264 = vmatprep.subr.mxu0 0.0
  %265 = vmatpush1.msra.mxu0 0.0
  %266 = vmatprep.subr.mxu0 0.0
  %267 = vmatpush1.msra.mxu0 0.0
  %268 = vmatprep.subr.mxu0 0.0
  %269 = vmatpush1.msra.mxu0 0.0
  %270 = vmatprep.subr.mxu0 0.0
  %271 = vmatpush1.msra.mxu0 0.0
  %272 = vmatprep.subr.mxu0 0.0
  %273 = vmatpush1.msra.mxu0 0.0
  %274 = vmatprep.subr.mxu0 0.0
  %275 = vmatpush1.msra.mxu0 0.0
  %276 = vmatprep.subr.mxu0 0.0
  %277 = vmatpush1.msra.mxu0 0.0
  %278 = vmatprep.subr.mxu0 0.0
  %279 = vmatpush1.msra.mxu0 0.0
  %280 = vmatprep.subr.mxu0 0.0
  %281 = vmatpush1.msra.mxu0 0.0
  %282 = vmatprep.subr.mxu0 0.0
  %283 = vmatpush1.msra.mxu0 0.0
  %284 = vmatprep.mubr.f32.mxu0 0.0
  %285 = vmatmul.mubr.f32.gmra.mrb[0].mxu0 %v218
  %v286 = vpop.f32.mrb[0].mxu0
  %v287 = vadd.f32 %v215, %v286
  %v288 = vpop.f32.mrb[0].mxu0
  %289 = vdwg.mxu0
  %v290 = vmax.f32 %v287, 0.0
  %s291 = scalar_lea.vmem %s3, 128
  %v292 = vld [vmem:[%s291] sm:$0xff]
  %v293 = vld [vmem:[%s291 + $0x8] sm:$0xff]
  %v294 = vld [vmem:[%s291 + $0x10] sm:$0xff]
  %v295 = vld [vmem:[%s291 + $0x18] sm:$0xff]
  %v296 = vld [vmem:[%s291 + $0x20] sm:$0xff]
  %v297 = vld [vmem:[%s291 + $0x28] sm:$0xff]
  %v298 = vld [vmem:[%s291 + $0x30] sm:$0xff]
  %v299 = vld [vmem:[%s291 + $0x38] sm:$0xff]
  %s300 = scalar_lea.vmem %s4, 2
  %v301 = vld [vmem:[%s300] sm:$0x1]
  %v303 = vlaneseq
  %v304 = vshrl.u32 %v303, 7
  %v305 = vsub.s32 0, %v304
  %v306 = vrot.slane %v301, %v305
  %v309 = vsel %vm125, %v290, 0
  %311 = vmatprep.subr.mxu0 0.0
  %312 = vmatpush1.msra.mxu0 %v292
  %313 = vmatprep.subr.mxu0 0.0
  %314 = vmatpush1.msra.mxu0 %v293
  %315 = vmatprep.subr.mxu0 0.0
  %316 = vmatpush1.msra.mxu0 %v294
  %317 = vmatprep.subr.mxu0 0.0
  %318 = vmatpush1.msra.mxu0 %v295
  %319 = vmatprep.subr.mxu0 0.0
  %320 = vmatpush1.msra.mxu0 %v296
  %321 = vmatprep.subr.mxu0 0.0
  %322 = vmatpush1.msra.mxu0 %v297
  %323 = vmatprep.subr.mxu0 0.0
  %324 = vmatpush1.msra.mxu0 %v298
  %325 = vmatprep.subr.mxu0 0.0
  %326 = vmatpush1.msra.mxu0 %v299
  %327 = vmatprep.subr.mxu0 0.0
  %328 = vmatpush1.msra.mxu0 0.0
  %329 = vmatprep.subr.mxu0 0.0
  %330 = vmatpush1.msra.mxu0 0.0
  %331 = vmatprep.subr.mxu0 0.0
  %332 = vmatpush1.msra.mxu0 0.0
  %333 = vmatprep.subr.mxu0 0.0
  %334 = vmatpush1.msra.mxu0 0.0
  %335 = vmatprep.subr.mxu0 0.0
  %336 = vmatpush1.msra.mxu0 0.0
  %337 = vmatprep.subr.mxu0 0.0
  %338 = vmatpush1.msra.mxu0 0.0
  %339 = vmatprep.subr.mxu0 0.0
  %340 = vmatpush1.msra.mxu0 0.0
  %341 = vmatprep.subr.mxu0 0.0
  %342 = vmatpush1.msra.mxu0 0.0
  %343 = vmatprep.subr.mxu0 0.0
  %344 = vmatpush1.msra.mxu0 0.0
  %345 = vmatprep.subr.mxu0 0.0
  %346 = vmatpush1.msra.mxu0 0.0
  %347 = vmatprep.subr.mxu0 0.0
  %348 = vmatpush1.msra.mxu0 0.0
  %349 = vmatprep.subr.mxu0 0.0
  %350 = vmatpush1.msra.mxu0 0.0
  %351 = vmatprep.subr.mxu0 0.0
  %352 = vmatpush1.msra.mxu0 0.0
  %353 = vmatprep.subr.mxu0 0.0
  %354 = vmatpush1.msra.mxu0 0.0
  %355 = vmatprep.subr.mxu0 0.0
  %356 = vmatpush1.msra.mxu0 0.0
  %357 = vmatprep.subr.mxu0 0.0
  %358 = vmatpush1.msra.mxu0 0.0
  %359 = vmatprep.subr.mxu0 0.0
  %360 = vmatpush1.msra.mxu0 0.0
  %361 = vmatprep.subr.mxu0 0.0
  %362 = vmatpush1.msra.mxu0 0.0
  %363 = vmatprep.subr.mxu0 0.0
  %364 = vmatpush1.msra.mxu0 0.0
  %365 = vmatprep.subr.mxu0 0.0
  %366 = vmatpush1.msra.mxu0 0.0
  %367 = vmatprep.subr.mxu0 0.0
  %368 = vmatpush1.msra.mxu0 0.0
  %369 = vmatprep.subr.mxu0 0.0
  %370 = vmatpush1.msra.mxu0 0.0
  %371 = vmatprep.subr.mxu0 0.0
  %372 = vmatpush1.msra.mxu0 0.0
  %373 = vmatprep.subr.mxu0 0.0
  %374 = vmatpush1.msra.mxu0 0.0
  %375 = vmatprep.mubr.f32.mxu0 0.0
  %376 = vmatmul.mubr.f32.gmra.mrb[0].mxu0 %v309
  %v377 = vpop.f32.mrb[0].mxu0
  %v378 = vadd.f32 %v306, %v377
  %v379 = vpop.f32.mrb[0].mxu0
  %380 = vdwg.mxu0
  %v381 = vmax.f32 %v378, 0.0
  %v382 = vld [vmem:[%s5] sm:$0xff]
  %v383 = vld [vmem:[%s5 + $0x8] sm:$0xff]
  %v384 = vld [vmem:[%s5 + $0x10] sm:$0xff]
  %v385 = vld [vmem:[%s5 + $0x18] sm:$0xff]
  %v386 = vld [vmem:[%s5 + $0x20] sm:$0xff]
  %v387 = vld [vmem:[%s5 + $0x28] sm:$0xff]
  %v388 = vld [vmem:[%s5 + $0x30] sm:$0xff]
  %v389 = vld [vmem:[%s5 + $0x38] sm:$0xff]
  %v390 = vld [vmem:[%s6] sm:$0x1]
  %v392 = vlaneseq
  %v393 = vshrl.u32 %v392, 7
  %v394 = vsub.s32 0, %v393
  %v395 = vrot.slane %v390, %v394
  %v398 = vsel %vm125, %v381, 0
  %400 = vmatprep.subr.mxu0 0.0
  %401 = vmatpush1.msra.mxu0 %v382
  %402 = vmatprep.subr.mxu0 0.0
  %403 = vmatpush1.msra.mxu0 %v383
  %404 = vmatprep.subr.mxu0 0.0
  %405 = vmatpush1.msra.mxu0 %v384
  %406 = vmatprep.subr.mxu0 0.0
  %407 = vmatpush1.msra.mxu0 %v385
  %408 = vmatprep.subr.mxu0 0.0
  %409 = vmatpush1.msra.mxu0 %v386
  %410 = vmatprep.subr.mxu0 0.0
  %411 = vmatpush1.msra.mxu0 %v387
  %412 = vmatprep.subr.mxu0 0.0
  %413 = vmatpush1.msra.mxu0 %v388
  %414 = vmatprep.subr.mxu0 0.0
  %415 = vmatpush1.msra.mxu0 %v389
  %416 = vmatprep.subr.mxu0 0.0
  %417 = vmatpush1.msra.mxu0 0.0
  %418 = vmatprep.subr.mxu0 0.0
  %419 = vmatpush1.msra.mxu0 0.0
  %420 = vmatprep.subr.mxu0 0.0
  %421 = vmatpush1.msra.mxu0 0.0
  %422 = vmatprep.subr.mxu0 0.0
  %423 = vmatpush1.msra.mxu0 0.0
  %424 = vmatprep.subr.mxu0 0.0
  %425 = vmatpush1.msra.mxu0 0.0
  %426 = vmatprep.subr.mxu0 0.0
  %427 = vmatpush1.msra.mxu0 0.0
  %428 = vmatprep.subr.mxu0 0.0
  %429 = vmatpush1.msra.mxu0 0.0
  %430 = vmatprep.subr.mxu0 0.0
  %431 = vmatpush1.msra.mxu0 0.0
  %432 = vmatprep.subr.mxu0 0.0
  %433 = vmatpush1.msra.mxu0 0.0
  %434 = vmatprep.subr.mxu0 0.0
  %435 = vmatpush1.msra.mxu0 0.0
  %436 = vmatprep.subr.mxu0 0.0
  %437 = vmatpush1.msra.mxu0 0.0
  %438 = vmatprep.subr.mxu0 0.0
  %439 = vmatpush1.msra.mxu0 0.0
  %440 = vmatprep.subr.mxu0 0.0
  %441 = vmatpush1.msra.mxu0 0.0
  %442 = vmatprep.subr.mxu0 0.0
  %443 = vmatpush1.msra.mxu0 0.0
  %444 = vmatprep.subr.mxu0 0.0
  %445 = vmatpush1.msra.mxu0 0.0
  %446 = vmatprep.subr.mxu0 0.0
  %447 = vmatpush1.msra.mxu0 0.0
  %448 = vmatprep.subr.mxu0 0.0
  %449 = vmatpush1.msra.mxu0 0.0
  %450 = vmatprep.subr.mxu0 0.0
  %451 = vmatpush1.msra.mxu0 0.0
  %452 = vmatprep.subr.mxu0 0.0
  %453 = vmatpush1.msra.mxu0 0.0
  %454 = vmatprep.subr.mxu0 0.0
  %455 = vmatpush1.msra.mxu0 0.0
  %456 = vmatprep.subr.mxu0 0.0
  %457 = vmatpush1.msra.mxu0 0.0
  %458 = vmatprep.subr.mxu0 0.0
  %459 = vmatpush1.msra.mxu0 0.0
  %460 = vmatprep.subr.mxu0 0.0
  %461 = vmatpush1.msra.mxu0 0.0
  %462 = vmatprep.subr.mxu0 0.0
  %463 = vmatpush1.msra.mxu0 0.0
  %464 = vmatprep.mubr.f32.mxu0 0.0
  %465 = vmatmul.mubr.f32.gmra.mrb[0].mxu0 %v398
  %v466 = vpop.f32.mrb[0].mxu0
  %v467 = vadd.f32 %v395, %v466
  %v468 = vpop.f32.mrb[0].mxu0
  %469 = vdwg.mxu0
  %470 = vst.msk [vmem:[%s7] sm:$0xff] %vm35, %v467
  // Predicated region
  $region30: #{qnetwork_forward.1} parent=0 // pred_check
    _
  $region31: #{qnetwork_forward.1} parent=0 // pred_check_branch
    %472 = sbr.rel (0) target = $region33
  $region32: #{qnetwork_forward.1} parent=0 // pred_region
    _
  $region33: #{qnetwork_forward.1} parent=0 // pred_fallthru
    _
  // Predicated region
  $region34: #{qnetwork_forward.1} parent=0 // pred_check
    _
  $region35: #{qnetwork_forward.1} parent=0 // pred_check_branch
    %474 = sbr.rel (0) target = $region37
  $region36: #{qnetwork_forward.1} parent=0 // pred_region
    _
  $region37: #{qnetwork_forward.1} parent=0 // pred_fallthru
    _

</llo_original>
